<compile_context>
chip_gen: v7x
topology: tpu7x:2x2x1
jax: 0.10.0
libtpu: 0.0.40
codegen_flags: <defaults>
</compile_context>

<pallas_src>
import functools
from typing import NamedTuple

import jax
import jax.numpy as jnp
from jax.experimental import pallas as pl
from jax.experimental.pallas import tpu as pltpu


def _round_up(x, m):
    return ((x + m - 1) // m) * m


def _vmem_capacity_bytes():
    """Physical VMEM of the current chip generation (conservative fallback)."""
    try:
        return int(pltpu.get_tpu_info().vmem_capacity_bytes)
    except Exception:
        return 64 * 1024 * 1024  # v7x per-TensorCore; safe lower bound everywhere


class MLPConfig(NamedTuple):
    """Static (hashable) geometry derived once at parameter-prep time."""
    D: int
    H: int
    C: int
    D_pad: int
    H_pad: int
    C_pad: int
    tk: int      # effective K tile (multiple of 256, divides D_pad)
    n_h: int     # hidden-dim split (1 on v5e/v6e; 2 on v7x -> CORE_PARALLEL)


def prepare_params(w1, b1, w2, b2, *, tk=12288, n_h=1, weight_dtype=jnp.bfloat16):
    """One-time weight prep: pad to kernel geometry and cast the streamed
    copies to bf16.  Do NOT call this per forward pass.

    w1: (D, H)  fc1 weight stored (in, out)  == torch fc1.weight.T
    b1: (H,)
    w2: (H, C)  fc2 weight stored (in, out)  == torch fc2.weight.T
    b2: (C,)
    """
    D, H = w1.shape
    H2, C = w2.shape
    assert H2 == H and b1.shape == (H,) and b2.shape == (C,), \
        "weights must be stored (in, out), i.e. transposed vs. torch.nn.Linear.weight"
    assert tk % 256 == 0 and n_h >= 1

    tk_eff = min(tk, _round_up(D, 256))          # clamp K tile to (padded) D
    D_pad = _round_up(D, tk_eff)
    if n_h == 1:
        H_pad = H                                # no H padding needed (full-dim block)
    else:
        H_pad = _round_up(H, 128 * n_h)          # each hidden block multiple of 128
    C_pad = _round_up(C, 128)                    # lane-dense output / fc2 tiles

    cfg = MLPConfig(D=D, H=H, C=C, D_pad=D_pad, H_pad=H_pad, C_pad=C_pad,
                    tk=tk_eff, n_h=n_h)

    w1_p = jnp.pad(w1, ((0, D_pad - D), (0, H_pad - H))).astype(weight_dtype)
    b1_p = jnp.pad(b1.astype(jnp.float32), ((0, H_pad - H),)).reshape(1, H_pad)
    w2_p = jnp.pad(w2, ((0, H_pad - H), (0, C_pad - C))).astype(weight_dtype)
    b2_p = b2.astype(jnp.float32)
    return cfg, (w1_p, b1_p, w2_p, b2_p)


def _mlp_kernel(x_ref, w1_ref, b1_ref, w2_ref, out_ref, h_acc):
    """grid = (n_h, n_k): axis 0 splits the hidden dim (CORE_PARALLEL on v7x),
    axis 1 tiles the fc1 reduction dim (arbitrary).  h_acc is a persistent
    f32 accumulator of shape (B_pad, H_blk)."""
    k = pl.program_id(1)

    @pl.when(k == 0)
    def _():
        h_acc[...] = jnp.zeros_like(h_acc)

    # Partial fc1: bf16 x bf16 on the MXU, f32 accumulation.
    h_acc[...] += jnp.dot(x_ref[...], w1_ref[...],
                          preferred_element_type=jnp.float32)

    @pl.when(k == pl.num_programs(1) - 1)
    def _():
        # fc1 bias + ReLU in f32; fc2 as bf16 x bf16 with f32 accumulation
        # (no f32 upcast / temp for W2).
        h = jnp.maximum(h_acc[...] + b1_ref[...], 0.0)
        out = jnp.dot(h.astype(w2_ref.dtype), w2_ref[...],
                      preferred_element_type=jnp.float32)
        out_ref[0] = out.astype(out_ref.dtype)


@functools.partial(jax.jit, static_argnames=("cfg",))
def simple_regression_net(x, w1_p, b1_p, w2_p, b2, cfg: MLPConfig):
    """Fused SimpleRegressionNet forward.

    x     : (B, ...) f32 — flattened internally (matches x.contiguous().view(B, -1))
    w1_p, b1_p, w2_p, b2 : outputs of prepare_params (pre-padded, pre-cast)
    Returns (B, C) f32.
    """
    B = x.shape[0]
    x2 = x.reshape(B, -1)
    assert x2.shape[1] == cfg.D, "input feature dim mismatch"

    D_pad, H_pad, C_pad = cfg.D_pad, cfg.H_pad, cfg.C_pad
    tk_eff, n_h = cfg.tk, cfg.n_h
    H_blk = H_pad // n_h
    n_k = D_pad // tk_eff
    B_pad = _round_up(B, 8)

    # x: cast to bf16 once (no per-step cast, half the x DMA), pad B and D.
    x_p = jnp.pad(x2.astype(w1_p.dtype),
                  ((0, B_pad - B), (0, D_pad - cfg.D)))

    w_bytes = jnp.dtype(w1_p.dtype).itemsize
    H_lanes = _round_up(H_blk, 128)

    # ---- VMEM budget (lane-padding aware) & generation-aware cap ----------
    vmem_est = (2 * B_pad * tk_eff * 2            # x tiles (bf16, double-buffered)
                + 2 * tk_eff * H_lanes * w_bytes  # W1 tiles (double-buffered)
                + 2 * 8 * H_lanes * 4             # b1
                + 2 * _round_up(H_blk, 8) * C_pad * w_bytes   # W2 (resident)
                + 2 * B_pad * C_pad * 4           # output block
                + B_pad * H_lanes * 4             # h_acc scratch
                + B_pad * H_lanes * 2)            # epilogue bf16 h temp
    vmem_cap = _vmem_capacity_bytes()
    vmem_limit = int(min(vmem_cap - 8 * 1024 * 1024,
                         max(32 * 1024 * 1024, vmem_est * 3 // 2)))
    vmem_limit = max(vmem_limit, 16 * 1024 * 1024)

    cost = pl.CostEstimate(
        flops=2 * B_pad * D_pad * H_pad + 2 * B_pad * H_pad * C_pad,
        transcendentals=0,
        bytes_accessed=(B_pad * D_pad * 2            # x (bf16)
                        + D_pad * H_pad * w_bytes    # W1 (dominant)
                        + H_pad * 4                  # b1
                        + H_pad * C_pad * w_bytes    # W2
                        + n_h * B_pad * C_pad * 4),  # partial outputs
    )

    # v7x: make the hidden split land on both TensorCores; elsewhere it's a
    # size-1 axis and plain "parallel" is a no-op.
    if n_h > 1:
        dims = (getattr(pltpu, "CORE_PARALLEL", "parallel"),
                getattr(pltpu, "ARBITRARY", "arbitrary"))
    else:
        dims = ("parallel", "arbitrary")

    partials = pl.pallas_call(
        _mlp_kernel,
        out_shape=jax.ShapeDtypeStruct((n_h, B_pad, C_pad), jnp.float32),
        grid_spec=pltpu.PrefetchScalarGridSpec(
            num_scalar_prefetch=0,
            grid=(n_h, n_k),
            in_specs=[
                pl.BlockSpec((B_pad, tk_eff), lambda hi, k: (0, k)),   # x  : K-tiled (bf16)
                pl.BlockSpec((tk_eff, H_blk), lambda hi, k: (k, hi)),  # W1 : K x H-split
                pl.BlockSpec((1, H_blk), lambda hi, k: (0, hi)),       # b1 : H-split
                pl.BlockSpec((H_blk, C_pad), lambda hi, k: (hi, 0)),   # W2 : resident over k
            ],
            out_specs=pl.BlockSpec((1, B_pad, C_pad), lambda hi, k: (hi, 0, 0)),
            scratch_shapes=[pltpu.VMEM((B_pad, H_blk), jnp.float32)],
        ),
        compiler_params=pltpu.CompilerParams(
            dimension_semantics=dims,
            vmem_limit_bytes=vmem_limit,
        ),
        cost_estimate=cost,
    )(x_p, w1_p, b1_p, w2_p)

    # Tiny epilogue: combine hidden-split partials, drop B/C padding, add b2 once.
    out = jnp.sum(partials, axis=0)[:B, :cfg.C] + b2[None, :]
    return out.astype(jnp.float32)


def init_params(key, input_dim, param_classes, dtype=jnp.float32):
    """Deterministic init mimicking nn.Linear's uniform(-1/sqrt(fan_in), ...)."""
    hidden = param_classes * 2
    k1, k2, k3, k4 = jax.random.split(key, 4)
    bound1 = 1.0 / (input_dim ** 0.5)
    bound2 = 1.0 / (hidden ** 0.5)
    # Stored as (in, out) == transpose of torch.nn.Linear.weight.
    w1 = jax.random.uniform(k1, (input_dim, hidden), dtype, -bound1, bound1)
    b1 = jax.random.uniform(k2, (hidden,), dtype, -bound1, bound1)
    w2 = jax.random.uniform(k3, (hidden, param_classes), dtype, -bound2, bound2)
    b2 = jax.random.uniform(k4, (param_classes,), dtype, -bound2, bound2)
    return w1, b1, w2, b2


if __name__ == "__main__":
    # Small stand-ins for the module's real dims (param_classes=343,
    # input_dim=107127): deliberately NON-aligned so the D padding / unpadded-H
    # path (needed for the real 107127-feature, 686-hidden net) is exercised.
    B = 4
    C_in, Hh, Ww = 3, 19, 19            # flattened D = 1083 (not tile-aligned)
    param_classes = 96                  # stands in for 343; hidden = 192
    input_dim = C_in * Hh * Ww

    key = jax.random.PRNGKey(0)
    kx, kp = jax.random.split(key)

    # Image-like input; the net flattens it (x.contiguous().view(B, -1)).
    x_img = jax.random.normal(kx, (B, C_in, Hh, Ww), jnp.float32)

    w1, b1, w2, b2 = init_params(kp, input_dim, param_classes)

    # One-time parameter prep (padding + bf16 cast hoisted out of the forward).
    # tk=512 here to exercise multi-step K accumulation at tiny demo dims;
    # at the real dims use the default tk=12288 and n_h=2 only on v7x.
    cfg, (w1_p, b1_p, w2_p, b2_p) = prepare_params(w1, b1, w2, b2, tk=512, n_h=1)

    out = simple_regression_net(x_img, w1_p, b1_p, w2_p, b2_p, cfg)
    out = jax.block_until_ready(out)

    x = x_img.reshape(B, -1)
    # Reference 1: same bf16-quantized operands (isolates kernel correctness).
    xq = x.astype(jnp.bfloat16).astype(jnp.float32)
    w1q = w1.astype(jnp.bfloat16).astype(jnp.float32)
    w2q = w2.astype(jnp.bfloat16).astype(jnp.float32)
    ref_q = jnp.maximum(xq @ w1q + b1, 0.0) @ w2q + b2
    # Reference 2: full-f32 PyTorch-equivalent forward (quantization budget).
    ref_f32 = jnp.maximum(x @ w1 + b1, 0.0) @ w2 + b2

    assert out.shape == (B, param_classes)
    assert jnp.allclose(out, ref_q, atol=5e-3, rtol=5e-3), "mismatch vs bf16 reference"
    assert jnp.allclose(out, ref_f32, atol=3e-2, rtol=3e-2), \
        "bf16 weight streaming exceeded f32 tolerance budget"

    print("KERNEL_OK")
</pallas_src>

<mosaic_0001>
module attributes {stable_mosaic.version = 11 : i64} {
  func.func @_mlp_kernel(%arg0: i32, %arg1: i32, %arg2: memref<8x512xbf16, #tpu.memory_space<vmem>>, %arg3: memref<512x192xbf16, #tpu.memory_space<vmem>>, %arg4: memref<1x192xf32, #tpu.memory_space<vmem>>, %arg5: memref<192x128xbf16, #tpu.memory_space<vmem>>, %arg6: memref<1x8x128xf32, #tpu.memory_space<vmem>>, %arg7: memref<8x192xf32, #tpu.memory_space<vmem>>) attributes {dimension_semantics = [#tpu.dimension_semantics<parallel>, #tpu.dimension_semantics<arbitrary>], iteration_bounds = array<i64: 1, 3>, scalar_prefetch = 0 : i64, scratch_operands = 1 : i64, tpu.core_type = #tpu.core_type<tc>, window_params = [{transform_indices = @transform_0, window_bounds = array<i64: 8, 512>}, {transform_indices = @transform_1, window_bounds = array<i64: 512, 192>}, {transform_indices = @transform_2, window_bounds = array<i64: 1, 192>}, {transform_indices = @transform_3, window_bounds = array<i64: 192, 128>}, {transform_indices = @transform_4, window_bounds = array<i64: 1, 8, 128>}]} {
    %c0_i32 = arith.constant 0 : i32
    %0 = arith.cmpi eq, %arg1, %c0_i32 : i32
    %1 = arith.extui %0 : i1 to i32
    %c0_i32_0 = arith.constant 0 : i32
    %2 = arith.cmpi ne, %1, %c0_i32_0 : i32
    scf.if %2 {
      %cst_9 = arith.constant 0.000000e+00 : f32
      %12 = vector.broadcast %cst_9 : f32 to vector<8x192xf32>
      %c0_10 = arith.constant 0 : index
      %c0_11 = arith.constant 0 : index
      %13 = vector.load %arg7[%c0_10, %c0_11] : memref<8x192xf32, #tpu.memory_space<vmem>>, vector<8x192xf32>
      tpu.vector_store %arg7[%c0_10, %c0_11], %12 {strides = array<i32>} : memref<8x192xf32, #tpu.memory_space<vmem>>, vector<8x192xf32>,
    } else {
    }
    %c0 = arith.constant 0 : index
    %c0_1 = arith.constant 0 : index
    %3 = vector.load %arg7[%c0, %c0_1] : memref<8x192xf32, #tpu.memory_space<vmem>>, vector<8x192xf32>
    %c0_2 = arith.constant 0 : index
    %c0_3 = arith.constant 0 : index
    %4 = vector.load %arg2[%c0_2, %c0_3] : memref<8x512xbf16, #tpu.memory_space<vmem>>, vector<8x512xbf16>
    %c0_4 = arith.constant 0 : index
    %c0_5 = arith.constant 0 : index
    %5 = vector.load %arg3[%c0_4, %c0_5] : memref<512x192xbf16, #tpu.memory_space<vmem>>, vector<512x192xbf16>
    %cst = arith.constant dense<0.000000e+00> : vector<8x192xf32>
    %6 = tpu.matmul %4, %5, %cst {dimension_numbers = #tpu.dot_dimension_numbers<[1], [0], [0], [1], [0, 0, 1, 1], [], []>} : vector<8x512xbf16>, vector<512x192xbf16>, vector<8x192xf32> -> vector<8x192xf32>
    %7 = arith.addf %3, %6 : vector<8x192xf32>
    %c0_6 = arith.constant 0 : index
    %c0_7 = arith.constant 0 : index
    %8 = vector.load %arg7[%c0_6, %c0_7] : memref<8x192xf32, #tpu.memory_space<vmem>>, vector<8x192xf32>
    tpu.vector_store %arg7[%c0_6, %c0_7], %7 {strides = array<i32>} : memref<8x192xf32, #tpu.memory_space<vmem>>, vector<8x192xf32>,
    %c2_i32 = arith.constant 2 : i32
    %9 = arith.cmpi eq, %arg1, %c2_i32 : i32
    %10 = arith.extui %9 : i1 to i32
    %c0_i32_8 = arith.constant 0 : i32
    %11 = arith.cmpi ne, %10, %c0_i32_8 : i32
    scf.if %11 {
      %c0_9 = arith.constant 0 : index
      %c0_10 = arith.constant 0 : index
      %12 = vector.load %arg7[%c0_9, %c0_10] : memref<8x192xf32, #tpu.memory_space<vmem>>, vector<8x192xf32>
      %c0_11 = arith.constant 0 : index
      %c0_12 = arith.constant 0 : index
      %13 = vector.load %arg4[%c0_11, %c0_12] : memref<1x192xf32, #tpu.memory_space<vmem>>, vector<1x192xf32>
      %14 = vector.broadcast %13 : vector<1x192xf32> to vector<8x192xf32>
      %15 = arith.addf %12, %14 : vector<8x192xf32>
      %cst_13 = arith.constant 0.000000e+00 : f32
      %16 = vector.broadcast %cst_13 : f32 to vector<8x192xf32>
      %17 = arith.maximumf %15, %16 : vector<8x192xf32>
      %18 = arith.truncf %17 : vector<8x192xf32> to vector<8x192xbf16>
      %c0_14 = arith.constant 0 : index
      %c0_15 = arith.constant 0 : index
      %19 = vector.load %arg5[%c0_14, %c0_15] : memref<192x128xbf16, #tpu.memory_space<vmem>>, vector<192x128xbf16>
      %cst_16 = arith.constant dense<0.000000e+00> : vector<8x128xf32>
      %20 = tpu.matmul %18, %19, %cst_16 {dimension_numbers = #tpu.dot_dimension_numbers<[1], [0], [0], [1], [0, 0, 1, 1], [], []>} : vector<8x192xbf16>, vector<192x128xbf16>, vector<8x128xf32> -> vector<8x128xf32>
      %c0_17 = arith.constant 0 : index
      %c0_18 = arith.constant 0 : index
      %c0_19 = arith.constant 0 : index
      %21 = vector.load %arg6[%c0_17, %c0_18, %c0_19] : memref<1x8x128xf32, #tpu.memory_space<vmem>>, vector<1x8x128xf32>
      %22 = vector.shape_cast %21 : vector<1x8x128xf32> to vector<8x128xf32>
      %23 = vector.shape_cast %20 : vector<8x128xf32> to vector<1x8x128xf32>
      tpu.vector_store %arg6[%c0_17, %c0_18, %c0_19], %23 {strides = array<i32>} : memref<1x8x128xf32, #tpu.memory_space<vmem>>, vector<1x8x128xf32>,
    } else {
    }
    return
  }
  func.func @transform_0(%arg0: i32, %arg1: i32) -> (i32, i32) {
    %c0_i32 = arith.constant 0 : i32
    %c0_i32_0 = arith.constant 0 : i32
    return %c0_i32, %arg1 : i32, i32
  }
  func.func @transform_1(%arg0: i32, %arg1: i32) -> (i32, i32) {
    %c0_i32 = arith.constant 0 : i32
    return %arg1, %arg0 : i32, i32
  }
  func.func @transform_2(%arg0: i32, %arg1: i32) -> (i32, i32) {
    %c0_i32 = arith.constant 0 : i32
    %c0_i32_0 = arith.constant 0 : i32
    return %c0_i32, %arg0 : i32, i32
  }
  func.func @transform_3(%arg0: i32, %arg1: i32) -> (i32, i32) {
    %c0_i32 = arith.constant 0 : i32
    %c0_i32_0 = arith.constant 0 : i32
    return %arg0, %c0_i32 : i32, i32
  }
  func.func @transform_4(%arg0: i32, %arg1: i32) -> (i32, i32, i32) {
    %c0_i32 = arith.constant 0 : i32
    %c0_i32_0 = arith.constant 0 : i32
    %c0_i32_1 = arith.constant 0 : i32
    return %arg0, %c0_i32, %c0_i32_0 : i32, i32, i32
  }
}

</mosaic_0001>

<llo_original>
// kernel: simple_regression_net.1
$region0: #{simple_regression_net.1}
  #allocation0 [shape = 'u32[]', space=smem, size = 0x4, offset = 0x4, fixed_abs, tag = 'smem constant byte address 0x4 - core index']
  #allocation1 [shape = 'u32[144,128]{1,0:T(1,128)}', space=vmem, size = 0x12000, scoped, tag = 'internal scratch']
  #allocation2 [shape = 'f32[8,192]{1,0:T(8,128)}', space=vmem, size = 0x2000, scoped, tag = 'scratch operand']
  %s0 = inlined_call_operand.vmem [shape: bf16[8,1536], index: 0, kind: input, shape index: {}]
  %s1 = inlined_call_operand.vmem [shape: bf16[1536,192], index: 1, kind: input, shape index: {}]
  %s2 = inlined_call_operand.vmem [shape: f32[1,192], index: 2, kind: input, shape index: {}]
  %s3 = inlined_call_operand.vmem [shape: bf16[192,128], index: 3, kind: input, shape index: {}]
  %s4 = inlined_call_operand.vmem [shape: f32[1,8,128], index: 4, kind: output, shape index: {}]
  %s5 = sld [smem:[#allocation0]]
  $region57: #{simple_regression_net.1} parent=0
    _
  %s7 = ssub.s32 1, %s5
  %s8 = scalar_select 0, %s7, %s5
  loop: start=0, step=1, limit=5
  $region2: #{simple_regression_net.1} parent=0 // loop_pre_header
    _
  $region3: #{simple_regression_net.1} parent=0 // loop_header
    %s10 = sphi 0, %s14
    %p11 = scmp.ge.s32.totalorder %s10, 5
    %s17 = sphi 0, %s29
    %s18 = sphi 0, %s25
    %s19 = sphi 0, %s17
    %s20 = sphi 0, %s18
    %s21 = sphi 0, %s19
    %s22 = sphi 0, %s20
    %s32 = sphi 0, %s34
    %s35 = sphi 0, %s32
    %s36 = sphi 0, %s35
    %s52 = sphi 0, %s36
    %s60 = sphi 0, %s62
    %s63 = sphi 0, %s60
    %s64 = sphi 0, %s63
    %s80 = sphi 0, %s64
    %s86 = sphi 0, %s88
    %s89 = sphi 0, %s86
    %s90 = sphi 0, %s89
    %s106 = sphi 0, %s90
    %s112 = sphi 0, %s114
    %s115 = sphi 0, %s112
    %s116 = sphi 0, %s115
    %s132 = sphi 0, %s116
    %s138 = sphi 0, %s140
    %s141 = sphi 0, %s138
    %s142 = sphi 0, %s141
    %s158 = sphi 0, %s142
  $region4: #{simple_regression_net.1} parent=0 // loop_header_branch
    %13 = sbr.rel (%p11) target = $region8
  $region5: #{simple_regression_net.1} parent=0 // loop_body
    %s15 = ssub.s32 %s10, 1
    %s16 = ssub.s32 %s10, 2
    %s23 = sadd.s32 1, %s18
    %p24 = scmp.ge.s32.totalorder %s23, 3
    %s25 = scalar_select %p24, 0, %s23
    %s26 = sadd.s32 1, %s17
    %s27 = scalar_select %p24, %s26, %s17
    %p28 = scmp.ge.s32.totalorder %s27, 1
    %s29 = scalar_select %p28, 0, %s27
    %s30 = ssub.s32 %s18, %s25
    %p31 = scmp.eq.s32.totalorder %s30, 0
    %s33 = sadd.s32 %s32, 1
    %s34 = scalar_select %p31, %s32, %s33
    %p37 = pneg %p31
    %p38 = scmp.eq.s32.totalorder %s10, 2
    %p39 = por %p37, %p38
    %p40 = scmp.ne.s32.totalorder %s32, %s35
    %p41 = scmp.eq.s32.totalorder %s10, 0
    %p42 = por %p40, %p41
    %p43 = scmp.ne.s32.totalorder %s32, %s35
    %p44 = scmp.eq.s32.totalorder %s15, 2
    %p45 = por %p43, %p44
    %p46 = scmp.ne.s32.totalorder %s35, %s36
    %p47 = scmp.eq.s32.totalorder %s15, 0
    %p48 = por %p46, %p47
    %p49 = scmp.ne.s32.totalorder %s35, %s36
    %p50 = scmp.eq.s32.totalorder %s16, 2
    %p51 = por %p49, %p50
    %p53 = scmp.ne.s32.totalorder %s36, %s52
    %p54 = scmp.eq.s32.totalorder %s16, 0
    %p55 = por %p53, %p54
    %s56 = ssub.s32 %s18, %s25
    %s57 = ssub.s32 %s17, %s29
    %s58 = sor.u32 %s56, %s57
    %p59 = scmp.eq.s32.totalorder %s58, 0
    %s61 = sadd.s32 %s60, 1
    %s62 = scalar_select %p59, %s60, %s61
    %p65 = pneg %p59
    %p66 = scmp.eq.s32.totalorder %s10, 2
    %p67 = por %p65, %p66
    %p68 = scmp.ne.s32.totalorder %s60, %s63
    %p69 = scmp.eq.s32.totalorder %s10, 0
    %p70 = por %p68, %p69
    %p71 = scmp.ne.s32.totalorder %s60, %s63
    %p72 = scmp.eq.s32.totalorder %s15, 2
    %p73 = por %p71, %p72
    %p74 = scmp.ne.s32.totalorder %s63, %s64
    %p75 = scmp.eq.s32.totalorder %s15, 0
    %p76 = por %p74, %p75
    %p77 = scmp.ne.s32.totalorder %s63, %s64
    %p78 = scmp.eq.s32.totalorder %s16, 2
    %p79 = por %p77, %p78
    %p81 = scmp.ne.s32.totalorder %s64, %s80
    %p82 = scmp.eq.s32.totalorder %s16, 0
    %p83 = por %p81, %p82
    %s84 = ssub.s32 %s17, %s29
    %p85 = scmp.eq.s32.totalorder %s84, 0
    %s87 = sadd.s32 %s86, 1
    %s88 = scalar_select %p85, %s86, %s87
    %p91 = pneg %p85
    %p92 = scmp.eq.s32.totalorder %s10, 2
    %p93 = por %p91, %p92
    %p94 = scmp.ne.s32.totalorder %s86, %s89
    %p95 = scmp.eq.s32.totalorder %s10, 0
    %p96 = por %p94, %p95
    %p97 = scmp.ne.s32.totalorder %s86, %s89
    %p98 = scmp.eq.s32.totalorder %s15, 2
    %p99 = por %p97, %p98
    %p100 = scmp.ne.s32.totalorder %s89, %s90
    %p101 = scmp.eq.s32.totalorder %s15, 0
    %p102 = por %p100, %p101
    %p103 = scmp.ne.s32.totalorder %s89, %s90
    %p104 = scmp.eq.s32.totalorder %s16, 2
    %p105 = por %p103, %p104
    %p107 = scmp.ne.s32.totalorder %s90, %s106
    %p108 = scmp.eq.s32.totalorder %s16, 0
    %p109 = por %p107, %p108
    %s110 = ssub.s32 %s17, %s29
    %p111 = scmp.eq.s32.totalorder %s110, 0
    %s113 = sadd.s32 %s112, 1
    %s114 = scalar_select %p111, %s112, %s113
    %p117 = pneg %p111
    %p118 = scmp.eq.s32.totalorder %s10, 2
    %p119 = por %p117, %p118
    %p120 = scmp.ne.s32.totalorder %s112, %s115
    %p121 = scmp.eq.s32.totalorder %s10, 0
    %p122 = por %p120, %p121
    %p123 = scmp.ne.s32.totalorder %s112, %s115
    %p124 = scmp.eq.s32.totalorder %s15, 2
    %p125 = por %p123, %p124
    %p126 = scmp.ne.s32.totalorder %s115, %s116
    %p127 = scmp.eq.s32.totalorder %s15, 0
    %p128 = por %p126, %p127
    %p129 = scmp.ne.s32.totalorder %s115, %s116
    %p130 = scmp.eq.s32.totalorder %s16, 2
    %p131 = por %p129, %p130
    %p133 = scmp.ne.s32.totalorder %s116, %s132
    %p134 = scmp.eq.s32.totalorder %s16, 0
    %p135 = por %p133, %p134
    %s136 = ssub.s32 %s17, %s29
    %p137 = scmp.eq.s32.totalorder %s136, 0
    %s139 = sadd.s32 %s138, 1
    %s140 = scalar_select %p137, %s138, %s139
    %p143 = pneg %p137
    %p144 = scmp.eq.s32.totalorder %s10, 2
    %p145 = por %p143, %p144
    %p146 = scmp.ne.s32.totalorder %s138, %s141
    %p147 = scmp.eq.s32.totalorder %s10, 0
    %p148 = por %p146, %p147
    %p149 = scmp.ne.s32.totalorder %s138, %s141
    %p150 = scmp.eq.s32.totalorder %s15, 2
    %p151 = por %p149, %p150
    %p152 = scmp.ne.s32.totalorder %s141, %s142
    %p153 = scmp.eq.s32.totalorder %s15, 0
    %p154 = por %p152, %p153
    %p155 = scmp.ne.s32.totalorder %s141, %s142
    %p156 = scmp.eq.s32.totalorder %s16, 2
    %p157 = por %p155, %p156
    %p159 = scmp.ne.s32.totalorder %s142, %s158
    %p160 = scmp.eq.s32.totalorder %s16, 0
    %p161 = por %p159, %p160
    %p162 = scmp.le.s32.totalorder 1, %s10
    %p163 = scmp.lt.s32.totalorder %s10, 4
    %p164 = pnand %p162, %p163
    %p165 = pneg %p164
    // Predicated region
    $region9: #{simple_regression_net.1} parent=5 // pred_check
      _
    $region10: #{simple_regression_net.1} parent=5 // pred_check_branch
      %167 = sbr.rel (%p164) target = $region12
    $region11: #{simple_regression_net.1} parent=5 // pred_region
      %s168 = ssub.s32 %s10, 1
      // Predicated region
      $region13: #{simple_regression_net.1} parent=11 // pred_check
        %p169 = pneg %p102
      $region14: #{simple_regression_net.1} parent=11 // pred_check_branch
        %171 = sbr.rel (%p169) target = $region16
      $region15: #{simple_regression_net.1} parent=11 // pred_region
        %s172 = smul.u32 2, %s19
        %p173 = scmp.lt.s32.totalorder %s172, 1
        %s174 = scalar_select %p173, %s172, 1
        %s175 = scalar_lea.vmem %s2, %s174
        %s176 = smul.u32 2, %s19
      $region16: #{simple_regression_net.1} parent=11 // pred_fallthru
        _
      // Predicated region
      $region17: #{simple_regression_net.1} parent=11 // pred_check
        %p177 = pneg %p128
      $region18: #{simple_regression_net.1} parent=11 // pred_check_branch
        %179 = sbr.rel (%p177) target = $region20
      $region19: #{simple_regression_net.1} parent=11 // pred_region
        %s180 = smul.u32 24, %s19
        %p181 = scmp.lt.s32.totalorder %s180, 23
        %s182 = scalar_select %p181, %s180, 23
        %s183 = smul.addr %s182, 4
        %s184 = scalar_lea.vmem %s3, %s183
        %s185 = smul.u32 24, %s19
      $region20: #{simple_regression_net.1} parent=11 // pred_fallthru
        _
    $region12: #{simple_regression_net.1} parent=5 // pred_fallthru
      _
    %p186 = scmp.lt.s32.totalorder %s10, 3
    // Predicated region
    $region21: #{simple_regression_net.1} parent=5 // pred_check
      %p187 = pneg %p186
    $region22: #{simple_regression_net.1} parent=5 // pred_check_branch
      %189 = sbr.rel (%p187) target = $region24
    $region23: #{simple_regression_net.1} parent=5 // pred_region
      // Predicated region
      $region25: #{simple_regression_net.1} parent=23 // pred_check
        %p190 = pneg %p42
      $region26: #{simple_regression_net.1} parent=23 // pred_check_branch
        %192 = sbr.rel (%p190) target = $region28
      $region27: #{simple_regression_net.1} parent=23 // pred_region
        %s193 = smul.u32 4, %s18
        %p194 = scmp.lt.s32.totalorder %s193, 11
        %s195 = scalar_select %p194, %s193, 11
        %s196 = smul.addr %s195, 4
        %s197 = scalar_lea.vmem %s0, %s196
        %s198 = smul.u32 4, %s18
      $region28: #{simple_regression_net.1} parent=23 // pred_fallthru
        _
      // Predicated region
      $region29: #{simple_regression_net.1} parent=23 // pred_check
        %p199 = pneg %p70
      $region30: #{simple_regression_net.1} parent=23 // pred_check_branch
        %201 = sbr.rel (%p199) target = $region32
      $region31: #{simple_regression_net.1} parent=23 // pred_region
        %s202 = smul.u32 64, %s18
        %s203 = smul.u32 2, %s17
        %p204 = scmp.lt.s32.totalorder %s202, 191
        %s205 = scalar_select %p204, %s202, 191
        %p206 = scmp.lt.s32.totalorder %s203, 1
        %s207 = scalar_select %p206, %s203, 1
        %s208 = smul.addr %s205, 2
        %s209 = sadd.s32 %s207, %s208
        %s210 = smul.addr %s209, 4
        %s211 = scalar_lea.vmem %s1, %s210
        %s212 = smul.u32 64, %s18
        %s213 = smul.u32 2, %s17
      $region32: #{simple_regression_net.1} parent=23 // pred_fallthru
        _
    $region24: #{simple_regression_net.1} parent=5 // pred_fallthru
      _
    %p214 = scmp.le.s32.totalorder 1, %s10
    %p215 = scmp.lt.s32.totalorder %s10, 4
    %p216 = pnand %p214, %p215
    %p217 = pneg %p216
    // Predicated region
    $region33: #{simple_regression_net.1} parent=5 // pred_check
      _
    $region34: #{simple_regression_net.1} parent=5 // pred_check_branch
      %219 = sbr.rel (%p216) target = $region36
    $region35: #{simple_regression_net.1} parent=5 // pred_region
      %s220 = ssub.s32 %s10, 1
      %s221 = smul.u32 4, %s20
      %p222 = scmp.lt.s32.totalorder %s221, 11
      %s223 = scalar_select %p222, %s221, 11
      %s224 = smul.addr %s223, 4
      %s225 = scalar_lea.vmem %s0, %s224
      %p226 = pneg %p48
      %p227 = pneg %p45
      %s228 = smul.u32 64, %s20
      %s229 = smul.u32 2, %s19
      %p230 = scmp.lt.s32.totalorder %s228, 191
      %s231 = scalar_select %p230, %s228, 191
      %p232 = scmp.lt.s32.totalorder %s229, 1
      %s233 = scalar_select %p232, %s229, 1
      %s234 = smul.addr %s231, 2
      %s235 = sadd.s32 %s233, %s234
      %s236 = smul.addr %s235, 4
      %s237 = scalar_lea.vmem %s1, %s236
      %p238 = pneg %p76
      %p239 = pneg %p73
      %s240 = smul.u32 2, %s19
      %p241 = scmp.lt.s32.totalorder %s240, 1
      %s242 = scalar_select %p241, %s240, 1
      %s243 = scalar_lea.vmem %s2, %s242
      %p244 = pneg %p102
      %p245 = pneg %p99
      %s246 = smul.u32 24, %s19
      %p247 = scmp.lt.s32.totalorder %s246, 23
      %s248 = scalar_select %p247, %s246, 23
      %s249 = smul.addr %s248, 4
      %s250 = scalar_lea.vmem %s3, %s249
      %p251 = pneg %p128
      %p252 = pneg %p125
      %p253 = pneg %p154
      %p254 = pneg %p151
      %p255 = scmp.lt.s32.totalorder %s19, 0
      %s256 = scalar_select %p255, %s19, 0
      %s257 = smul.addr %s256, 8
      %s258 = scalar_lea.vmem %s4, %s257
      %s259 = smul.u32 4, %s20
      %p260 = scmp.lt.s32.totalorder %s259, 11
      %s261 = scalar_select %p260, %s259, 11
      %s262 = smul.addr %s261, 4
      %s263 = scalar_lea.vmem %s0, %s262
      %s264 = smul.u32 4, %s20
      %s265 = smul.u32 64, %s20
      %s266 = smul.u32 2, %s19
      %p267 = scmp.lt.s32.totalorder %s265, 191
      %s268 = scalar_select %p267, %s265, 191
      %p269 = scmp.lt.s32.totalorder %s266, 1
      %s270 = scalar_select %p269, %s266, 1
      %s271 = smul.addr %s268, 2
      %s272 = sadd.s32 %s270, %s271
      %s273 = smul.addr %s272, 4
      %s274 = scalar_lea.vmem %s1, %s273
      %s275 = smul.u32 64, %s20
      %s276 = smul.u32 2, %s19
      %s277 = smul.u32 2, %s19
      %p278 = scmp.lt.s32.totalorder %s277, 1
      %s279 = scalar_select %p278, %s277, 1
      %s280 = scalar_lea.vmem %s2, %s279
      %s281 = smul.u32 2, %s19
      %s282 = smul.u32 24, %s19
      %p283 = scmp.lt.s32.totalorder %s282, 23
      %s284 = scalar_select %p283, %s282, 23
      %s285 = smul.addr %s284, 4
      %s286 = scalar_lea.vmem %s3, %s285
      %s287 = smul.u32 24, %s19
      %p288 = scmp.lt.s32.totalorder %s19, 0
      %s289 = scalar_select %p288, %s19, 0
      %s290 = smul.addr %s289, 8
      %s291 = scalar_lea.vmem %s4, %s290
      %p293 = scmp.eq.s32.totalorder %s20, 0
      // Predicated region
      $region37: #{simple_regression_net.1} parent=35 // pred_check
        %p294 = pneg %p293
      $region38: #{simple_regression_net.1} parent=35 // pred_check_branch
        %296 = sbr.rel (%p294) target = $region40
      $region39: #{simple_regression_net.1} parent=35 // pred_region
        %297 = vst [vmem:[#allocation2] sm:$0xff] 0.0
        %vm298 = vcmask 523264
        %299 = vst.msk [vmem:[#allocation2 + $0x8] sm:$0xff] %vm298, 0.0
      $region40: #{simple_regression_net.1} parent=35 // pred_fallthru
        _
      %v300 = vld [vmem:[#allocation2] sm:$0xff]
      %v301 = vld [vmem:[#allocation2 + $0x8] sm:$0xff]
      %v302 = vld [vmem:[%s263] sm:$0xff]
      %v303 = vld [vmem:[%s263 + $0x8] sm:$0xff]
      %v304 = vld [vmem:[%s274] sm:$0xff]
      %v305 = vld [vmem:[%s274 + $0x8] sm:$0xff]
      %v306 = vld [vmem:[%s274 + $0x10] sm:$0xff]
      %v307 = vld [vmem:[%s274 + $0x18] sm:$0xff]
      %v308 = vld [vmem:[%s274 + $0x20] sm:$0xff]
      %v309 = vld [vmem:[%s274 + $0x28] sm:$0xff]
      %v310 = vld [vmem:[%s274 + $0x30] sm:$0xff]
      %v311 = vld [vmem:[%s274 + $0x38] sm:$0xff]
      %v312 = vld [vmem:[%s274 + $0x40] sm:$0xff]
      %v313 = vld [vmem:[%s274 + $0x48] sm:$0xff]
      %v314 = vld [vmem:[%s274 + $0x50] sm:$0xff]
      %v315 = vld [vmem:[%s274 + $0x58] sm:$0xff]
      %v316 = vld [vmem:[%s274 + $0x60] sm:$0xff]
      %v317 = vld [vmem:[%s274 + $0x68] sm:$0xff]
      %v318 = vld [vmem:[%s274 + $0x70] sm:$0xff]
      %v319 = vld [vmem:[%s274 + $0x78] sm:$0xff]
      %v320 = vld [vmem:[%s274 + $0x80] sm:$0xff]
      %v321 = vld [vmem:[%s274 + $0x88] sm:$0xff]
      %v322 = vld [vmem:[%s274 + $0x90] sm:$0xff]
      %v323 = vld [vmem:[%s274 + $0x98] sm:$0xff]
      %v324 = vld [vmem:[%s274 + $0xa0] sm:$0xff]
      %v325 = vld [vmem:[%s274 + $0xa8] sm:$0xff]
      %v326 = vld [vmem:[%s274 + $0xb0] sm:$0xff]
      %v327 = vld [vmem:[%s274 + $0xb8] sm:$0xff]
      %v328 = vld [vmem:[%s274 + $0xc0] sm:$0xff]
      %v329 = vld [vmem:[%s274 + $0xc8] sm:$0xff]
      %v330 = vld [vmem:[%s274 + $0xd0] sm:$0xff]
      %v331 = vld [vmem:[%s274 + $0xd8] sm:$0xff]
      %v332 = vld [vmem:[%s274 + $0xe0] sm:$0xff]
      %v333 = vld [vmem:[%s274 + $0xe8] sm:$0xff]
      %v334 = vld [vmem:[%s274 + $0xf0] sm:$0xff]
      %v335 = vld [vmem:[%s274 + $0xf8] sm:$0xff]
      %v336 = vld [vmem:[%s274 + $0x100] sm:$0xff]
      %v337 = vld [vmem:[%s274 + $0x108] sm:$0xff]
      %v338 = vld [vmem:[%s274 + $0x110] sm:$0xff]
      %v339 = vld [vmem:[%s274 + $0x118] sm:$0xff]
      %v340 = vld [vmem:[%s274 + $0x120] sm:$0xff]
      %v341 = vld [vmem:[%s274 + $0x128] sm:$0xff]
      %v342 = vld [vmem:[%s274 + $0x130] sm:$0xff]
      %v343 = vld [vmem:[%s274 + $0x138] sm:$0xff]
      %v344 = vld [vmem:[%s274 + $0x140] sm:$0xff]
      %v345 = vld [vmem:[%s274 + $0x148] sm:$0xff]
      %v346 = vld [vmem:[%s274 + $0x150] sm:$0xff]
      %v347 = vld [vmem:[%s274 + $0x158] sm:$0xff]
      %v348 = vld [vmem:[%s274 + $0x160] sm:$0xff]
      %v349 = vld [vmem:[%s274 + $0x168] sm:$0xff]
      %v350 = vld [vmem:[%s274 + $0x170] sm:$0xff]
      %v351 = vld [vmem:[%s274 + $0x178] sm:$0xff]
      %v352 = vld [vmem:[%s274 + $0x180] sm:$0xff]
      %v353 = vld [vmem:[%s274 + $0x188] sm:$0xff]
      %v354 = vld [vmem:[%s274 + $0x190] sm:$0xff]
      %v355 = vld [vmem:[%s274 + $0x198] sm:$0xff]
      %v356 = vld [vmem:[%s274 + $0x1a0] sm:$0xff]
      %v357 = vld [vmem:[%s274 + $0x1a8] sm:$0xff]
      %v358 = vld [vmem:[%s274 + $0x1b0] sm:$0xff]
      %v359 = vld [vmem:[%s274 + $0x1b8] sm:$0xff]
      %v360 = vld [vmem:[%s274 + $0x1c0] sm:$0xff]
      %v361 = vld [vmem:[%s274 + $0x1c8] sm:$0xff]
      %v362 = vld [vmem:[%s274 + $0x1d0] sm:$0xff]
      %v363 = vld [vmem:[%s274 + $0x1d8] sm:$0xff]
      %v364 = vld [vmem:[%s274 + $0x1e0] sm:$0xff]
      %v365 = vld [vmem:[%s274 + $0x1e8] sm:$0xff]
      %v366 = vld [vmem:[%s274 + $0x1f0] sm:$0xff]
      %v367 = vld [vmem:[%s274 + $0x1f8] sm:$0xff]
      %v370 = vunpack.c.l.b16 %v302
      %v371 = vunpack.c.h.b16 %v302
      %v372 = vunpack.c.l.b16 %v303
      %v373 = vunpack.c.h.b16 %v303
      %v374 = vpack.c.b16 %v370, %v370
      %v375 = vpack.c.b16 %v371, %v371
      %v376 = vpack.c.b16 %v372, %v372
      %v377 = vpack.c.b16 %v373, %v373
      %v446 = vunpack.c.l.b16 %v304
      %v447 = vunpack.c.h.b16 %v304
      %v448 = vunpack.c.l.b16 %v305
      %v449 = vunpack.c.h.b16 %v305
      %v450 = vunpack.c.l.b16 %v306
      %v451 = vunpack.c.h.b16 %v306
      %v452 = vunpack.c.l.b16 %v307
      %v453 = vunpack.c.h.b16 %v307
      %v454 = vunpack.c.l.b16 %v308
      %v455 = vunpack.c.h.b16 %v308
      %v456 = vunpack.c.l.b16 %v309
      %v457 = vunpack.c.h.b16 %v309
      %v458 = vunpack.c.l.b16 %v310
      %v459 = vunpack.c.h.b16 %v310
      %v460 = vunpack.c.l.b16 %v311
      %v461 = vunpack.c.h.b16 %v311
      %v462 = vunpack.c.l.b16 %v312
      %v463 = vunpack.c.h.b16 %v312
      %v464 = vunpack.c.l.b16 %v313
      %v465 = vunpack.c.h.b16 %v313
      %v466 = vunpack.c.l.b16 %v314
      %v467 = vunpack.c.h.b16 %v314
      %v468 = vunpack.c.l.b16 %v315
      %v469 = vunpack.c.h.b16 %v315
      %v470 = vunpack.c.l.b16 %v316
      %v471 = vunpack.c.h.b16 %v316
      %v472 = vunpack.c.l.b16 %v317
      %v473 = vunpack.c.h.b16 %v317
      %v474 = vunpack.c.l.b16 %v318
      %v475 = vunpack.c.h.b16 %v318
      %v476 = vunpack.c.l.b16 %v319
      %v477 = vunpack.c.h.b16 %v319
      %v478 = vunpack.c.l.b16 %v320
      %v479 = vunpack.c.h.b16 %v320
      %v480 = vunpack.c.l.b16 %v321
      %v481 = vunpack.c.h.b16 %v321
      %v482 = vunpack.c.l.b16 %v322
      %v483 = vunpack.c.h.b16 %v322
      %v484 = vunpack.c.l.b16 %v323
      %v485 = vunpack.c.h.b16 %v323
      %v486 = vunpack.c.l.b16 %v324
      %v487 = vunpack.c.h.b16 %v324
      %v488 = vunpack.c.l.b16 %v325
      %v489 = vunpack.c.h.b16 %v325
      %v490 = vunpack.c.l.b16 %v326
      %v491 = vunpack.c.h.b16 %v326
      %v492 = vunpack.c.l.b16 %v327
      %v493 = vunpack.c.h.b16 %v327
      %v494 = vunpack.c.l.b16 %v328
      %v495 = vunpack.c.h.b16 %v328
      %v496 = vunpack.c.l.b16 %v329
      %v497 = vunpack.c.h.b16 %v329
      %v498 = vunpack.c.l.b16 %v330
      %v499 = vunpack.c.h.b16 %v330
      %v500 = vunpack.c.l.b16 %v331
      %v501 = vunpack.c.h.b16 %v331
      %v502 = vunpack.c.l.b16 %v332
      %v503 = vunpack.c.h.b16 %v332
      %v504 = vunpack.c.l.b16 %v333
      %v505 = vunpack.c.h.b16 %v333
      %v506 = vunpack.c.l.b16 %v334
      %v507 = vunpack.c.h.b16 %v334
      %v508 = vunpack.c.l.b16 %v335
      %v509 = vunpack.c.h.b16 %v335
      %v510 = vunpack.c.l.b16 %v336
      %v511 = vunpack.c.h.b16 %v336
      %v512 = vunpack.c.l.b16 %v337
      %v513 = vunpack.c.h.b16 %v337
      %v514 = vunpack.c.l.b16 %v338
      %v515 = vunpack.c.h.b16 %v338
      %v516 = vunpack.c.l.b16 %v339
      %v517 = vunpack.c.h.b16 %v339
      %v518 = vunpack.c.l.b16 %v340
      %v519 = vunpack.c.h.b16 %v340
      %v520 = vunpack.c.l.b16 %v341
      %v521 = vunpack.c.h.b16 %v341
      %v522 = vunpack.c.l.b16 %v342
      %v523 = vunpack.c.h.b16 %v342
      %v524 = vunpack.c.l.b16 %v343
      %v525 = vunpack.c.h.b16 %v343
      %v526 = vunpack.c.l.b16 %v344
      %v527 = vunpack.c.h.b16 %v344
      %v528 = vunpack.c.l.b16 %v345
      %v529 = vunpack.c.h.b16 %v345
      %v530 = vunpack.c.l.b16 %v346
      %v531 = vunpack.c.h.b16 %v346
      %v532 = vunpack.c.l.b16 %v347
      %v533 = vunpack.c.h.b16 %v347
      %v534 = vunpack.c.l.b16 %v348
      %v535 = vunpack.c.h.b16 %v348
      %v536 = vunpack.c.l.b16 %v349
      %v537 = vunpack.c.h.b16 %v349
      %v538 = vunpack.c.l.b16 %v350
      %v539 = vunpack.c.h.b16 %v350
      %v540 = vunpack.c.l.b16 %v351
      %v541 = vunpack.c.h.b16 %v351
      %v542 = vunpack.c.l.b16 %v352
      %v543 = vunpack.c.h.b16 %v352
      %v544 = vunpack.c.l.b16 %v353
      %v545 = vunpack.c.h.b16 %v353
      %v546 = vunpack.c.l.b16 %v354
      %v547 = vunpack.c.h.b16 %v354
      %v548 = vunpack.c.l.b16 %v355
      %v549 = vunpack.c.h.b16 %v355
      %v550 = vunpack.c.l.b16 %v356
      %v551 = vunpack.c.h.b16 %v356
      %v552 = vunpack.c.l.b16 %v357
      %v553 = vunpack.c.h.b16 %v357
      %v554 = vunpack.c.l.b16 %v358
      %v555 = vunpack.c.h.b16 %v358
      %v556 = vunpack.c.l.b16 %v359
      %v557 = vunpack.c.h.b16 %v359
      %v558 = vunpack.c.l.b16 %v360
      %v559 = vunpack.c.h.b16 %v360
      %v560 = vunpack.c.l.b16 %v361
      %v561 = vunpack.c.h.b16 %v361
      %v562 = vunpack.c.l.b16 %v362
      %v563 = vunpack.c.h.b16 %v362
      %v564 = vunpack.c.l.b16 %v363
      %v565 = vunpack.c.h.b16 %v363
      %v566 = vunpack.c.l.b16 %v364
      %v567 = vunpack.c.h.b16 %v364
      %v568 = vunpack.c.l.b16 %v365
      %v569 = vunpack.c.h.b16 %v365
      %v570 = vunpack.c.l.b16 %v366
      %v571 = vunpack.c.h.b16 %v366
      %v572 = vunpack.c.l.b16 %v367
      %v573 = vunpack.c.h.b16 %v367
      %v574 = vpack.c.b16 %v448, %v446
      %v575 = vpack.c.b16 %v449, %v447
      %v576 = vpack.c.b16 %v452, %v450
      %v577 = vpack.c.b16 %v453, %v451
      %v578 = vpack.c.b16 %v456, %v454
      %v579 = vpack.c.b16 %v457, %v455
      %v580 = vpack.c.b16 %v460, %v458
      %v581 = vpack.c.b16 %v461, %v459
      %v582 = vpack.c.b16 %v464, %v462
      %v583 = vpack.c.b16 %v465, %v463
      %v584 = vpack.c.b16 %v468, %v466
      %v585 = vpack.c.b16 %v469, %v467
      %v586 = vpack.c.b16 %v472, %v470
      %v587 = vpack.c.b16 %v473, %v471
      %v588 = vpack.c.b16 %v476, %v474
      %v589 = vpack.c.b16 %v477, %v475
      %v590 = vpack.c.b16 %v480, %v478
      %v591 = vpack.c.b16 %v481, %v479
      %v592 = vpack.c.b16 %v484, %v482
      %v593 = vpack.c.b16 %v485, %v483
      %v594 = vpack.c.b16 %v488, %v486
      %v595 = vpack.c.b16 %v489, %v487
      %v596 = vpack.c.b16 %v492, %v490
      %v597 = vpack.c.b16 %v493, %v491
      %v598 = vpack.c.b16 %v496, %v494
      %v599 = vpack.c.b16 %v497, %v495
      %v600 = vpack.c.b16 %v500, %v498
      %v601 = vpack.c.b16 %v501, %v499
      %v602 = vpack.c.b16 %v504, %v502
      %v603 = vpack.c.b16 %v505, %v503
      %v604 = vpack.c.b16 %v508, %v506
      %v605 = vpack.c.b16 %v509, %v507
      %v606 = vpack.c.b16 %v512, %v510
      %v607 = vpack.c.b16 %v513, %v511
      %v608 = vpack.c.b16 %v516, %v514
      %v609 = vpack.c.b16 %v517, %v515
      %v610 = vpack.c.b16 %v520, %v518
      %v611 = vpack.c.b16 %v521, %v519
      %v612 = vpack.c.b16 %v524, %v522
      %v613 = vpack.c.b16 %v525, %v523
      %v614 = vpack.c.b16 %v528, %v526
      %v615 = vpack.c.b16 %v529, %v527
      %v616 = vpack.c.b16 %v532, %v530
      %v617 = vpack.c.b16 %v533, %v531
      %v618 = vpack.c.b16 %v536, %v534
      %v619 = vpack.c.b16 %v537, %v535
      %v620 = vpack.c.b16 %v540, %v538
      %v621 = vpack.c.b16 %v541, %v539
      %v622 = vpack.c.b16 %v544, %v542
      %v623 = vpack.c.b16 %v545, %v543
      %v624 = vpack.c.b16 %v548, %v546
      %v625 = vpack.c.b16 %v549, %v547
      %v626 = vpack.c.b16 %v552, %v550
      %v627 = vpack.c.b16 %v553, %v551
      %v628 = vpack.c.b16 %v556, %v554
      %v629 = vpack.c.b16 %v557, %v555
      %v630 = vpack.c.b16 %v560, %v558
      %v631 = vpack.c.b16 %v561, %v559
      %v632 = vpack.c.b16 %v564, %v562
      %v633 = vpack.c.b16 %v565, %v563
      %v634 = vpack.c.b16 %v568, %v566
      %v635 = vpack.c.b16 %v569, %v567
      %v636 = vpack.c.b16 %v572, %v570
      %v637 = vpack.c.b16 %v573, %v571
      %702 = vmatprep.subr.bf16.mxu0 %v575
      %703 = vmatpush1.bf16.msra.mxu0 %v574
      %704 = vmatprep.subr.bf16.mxu0 %v577
      %705 = vmatpush1.bf16.msra.mxu0 %v576
      %706 = vmatprep.subr.bf16.mxu0 %v579
      %707 = vmatpush1.bf16.msra.mxu0 %v578
      %708 = vmatprep.subr.bf16.mxu0 %v581
      %709 = vmatpush1.bf16.msra.mxu0 %v580
      %710 = vmatprep.subr.bf16.mxu0 %v583
      %711 = vmatpush1.bf16.msra.mxu0 %v582
      %712 = vmatprep.subr.bf16.mxu0 %v585
      %713 = vmatpush1.bf16.msra.mxu0 %v584
      %714 = vmatprep.subr.bf16.mxu0 %v587
      %715 = vmatpush1.bf16.msra.mxu0 %v586
      %716 = vmatprep.subr.bf16.mxu0 %v589
      %717 = vmatpush1.bf16.msra.mxu0 %v588
      %718 = vmatprep.subr.bf16.mxu0 %v591
      %719 = vmatpush1.bf16.msra.mxu0 %v590
      %720 = vmatprep.subr.bf16.mxu0 %v593
      %721 = vmatpush1.bf16.msra.mxu0 %v592
      %722 = vmatprep.subr.bf16.mxu0 %v595
      %723 = vmatpush1.bf16.msra.mxu0 %v594
      %724 = vmatprep.subr.bf16.mxu0 %v597
      %725 = vmatpush1.bf16.msra.mxu0 %v596
      %726 = vmatprep.subr.bf16.mxu0 %v599
      %727 = vmatpush1.bf16.msra.mxu0 %v598
      %728 = vmatprep.subr.bf16.mxu0 %v601
      %729 = vmatpush1.bf16.msra.mxu0 %v600
      %730 = vmatprep.subr.bf16.mxu0 %v603
      %731 = vmatpush1.bf16.msra.mxu0 %v602
      %732 = vmatprep.subr.bf16.mxu0 %v605
      %733 = vmatpush1.bf16.msra.mxu0 %v604
      %734 = vmatprep.mubr.bf16.mxu0 %v375
      %735 = vmatmul.mubr.bf16.gmra.mrb[0].mxu0 %v374
      %v736 = vpop.f32.mrb[0].mxu0
      %v737 = vadd.f32 0.0, %v736
      %v738 = vpop.f32.mrb[0].mxu0
      %v739 = vadd.f32 0.0, %v738
      %v740 = vpop.f32.mrb[0].mxu0
      %v741 = vpop.f32.mrb[0].mxu0
      %742 = vdwg.mxu0
      %743 = vmatprep.subr.bf16.mxu0 %v607
      %744 = vmatpush1.bf16.msra.mxu0 %v606
      %745 = vmatprep.subr.bf16.mxu0 %v609
      %746 = vmatpush1.bf16.msra.mxu0 %v608
      %747 = vmatprep.subr.bf16.mxu0 %v611
      %748 = vmatpush1.bf16.msra.mxu0 %v610
      %749 = vmatprep.subr.bf16.mxu0 %v613
      %750 = vmatpush1.bf16.msra.mxu0 %v612
      %751 = vmatprep.subr.bf16.mxu0 %v615
      %752 = vmatpush1.bf16.msra.mxu0 %v614
      %753 = vmatprep.subr.bf16.mxu0 %v617
      %754 = vmatpush1.bf16.msra.mxu0 %v616
      %755 = vmatprep.subr.bf16.mxu0 %v619
      %756 = vmatpush1.bf16.msra.mxu0 %v618
      %757 = vmatprep.subr.bf16.mxu0 %v621
      %758 = vmatpush1.bf16.msra.mxu0 %v620
      %759 = vmatprep.subr.bf16.mxu0 %v623
      %760 = vmatpush1.bf16.msra.mxu0 %v622
      %761 = vmatprep.subr.bf16.mxu0 %v625
      %762 = vmatpush1.bf16.msra.mxu0 %v624
      %763 = vmatprep.subr.bf16.mxu0 %v627
      %764 = vmatpush1.bf16.msra.mxu0 %v626
      %765 = vmatprep.subr.bf16.mxu0 %v629
      %766 = vmatpush1.bf16.msra.mxu0 %v628
      %767 = vmatprep.subr.bf16.mxu0 %v631
      %768 = vmatpush1.bf16.msra.mxu0 %v630
      %769 = vmatprep.subr.bf16.mxu0 %v633
      %770 = vmatpush1.bf16.msra.mxu0 %v632
      %771 = vmatprep.subr.bf16.mxu0 %v635
      %772 = vmatpush1.bf16.msra.mxu0 %v634
      %773 = vmatprep.subr.bf16.mxu0 %v637
      %774 = vmatpush1.bf16.msra.mxu0 %v636
      %775 = vmatprep.mubr.bf16.mxu0 %v377
      %776 = vmatmul.mubr.bf16.gmra.mrb[0].mxu0 %v376
      %v777 = vpop.f32.mrb[0].mxu0
      %v778 = vadd.f32 %v737, %v777
      %v779 = vpop.f32.mrb[0].mxu0
      %v780 = vadd.f32 %v739, %v779
      %v781 = vpop.f32.mrb[0].mxu0
      %v782 = vpop.f32.mrb[0].mxu0
      %783 = vdwg.mxu0
      %v784 = vadd.f32 %v300, %v778
      %v785 = vadd.f32 %v301, %v780
      %786 = vst [vmem:[#allocation2] sm:$0xff] %v784
      %vm787 = vcmask 523264
      %788 = vst.msk [vmem:[#allocation2 + $0x8] sm:$0xff] %vm787, %v785
      %p789 = scmp.eq.s32.totalorder %s20, 2
      // Predicated region
      $region41: #{simple_regression_net.1} parent=35 // pred_check
        %p790 = pneg %p789
      $region42: #{simple_regression_net.1} parent=35 // pred_check_branch
        %792 = sbr.rel (%p790) target = $region44
      $region43: #{simple_regression_net.1} parent=35 // pred_region
        %v793 = vld [vmem:[#allocation2] sm:$0xff]
        %v794 = vld [vmem:[#allocation2 + $0x8] sm:$0xff]
        %v795 = vld [vmem:[%s280] sm:$0x3]
        %v797 = vlaneseq
        %v798 = vshrl.u32 %v797, 7
        %v799 = vsub.s32 0, %v798
        %v800 = vrot.slane %v795, %v799
        %v801 = vlaneseq
        %v802 = vshrl.u32 %v801, 7
        %v803 = vsub.s32 1, %v802
        %v804 = vrot.slane %v795, %v803
        %v807 = vadd.f32 %v793, %v800
        %v808 = vadd.f32 %v794, %v804
        %v809 = vmax.f32 %v807, 0.0
        %v810 = vmax.f32 %v808, 0.0
        %v811 = vpack.c.bf16 %v809, %v809
        %v812 = vpack.c.bf16 %v810, %v810
        %v813 = vld [vmem:[%s286] sm:$0xf]
        %v814 = vld [vmem:[%s286 + $0x4] sm:$0xf]
        %v815 = vld [vmem:[%s286 + $0x8] sm:$0xf]
        %v816 = vld [vmem:[%s286 + $0xc] sm:$0xf]
        %v817 = vld [vmem:[%s286 + $0x10] sm:$0xf]
        %v818 = vld [vmem:[%s286 + $0x14] sm:$0xf]
        %v819 = vld [vmem:[%s286 + $0x18] sm:$0xf]
        %v820 = vld [vmem:[%s286 + $0x1c] sm:$0xf]
        %v821 = vld [vmem:[%s286 + $0x20] sm:$0xf]
        %v822 = vld [vmem:[%s286 + $0x24] sm:$0xf]
        %v823 = vld [vmem:[%s286 + $0x28] sm:$0xf]
        %v824 = vld [vmem:[%s286 + $0x2c] sm:$0xf]
        %v825 = vld [vmem:[%s286 + $0x30] sm:$0xf]
        %v826 = vld [vmem:[%s286 + $0x34] sm:$0xf]
        %v827 = vld [vmem:[%s286 + $0x38] sm:$0xf]
        %v828 = vld [vmem:[%s286 + $0x3c] sm:$0xf]
        %v829 = vld [vmem:[%s286 + $0x40] sm:$0xf]
        %v830 = vld [vmem:[%s286 + $0x44] sm:$0xf]
        %v831 = vld [vmem:[%s286 + $0x48] sm:$0xf]
        %v832 = vld [vmem:[%s286 + $0x4c] sm:$0xf]
        %v833 = vld [vmem:[%s286 + $0x50] sm:$0xf]
        %v834 = vld [vmem:[%s286 + $0x54] sm:$0xf]
        %v835 = vld [vmem:[%s286 + $0x58] sm:$0xf]
        %v836 = vld [vmem:[%s286 + $0x5c] sm:$0xf]
        %v861 = vunpack.c.l.b16 %v813
        %v862 = vunpack.c.l.b16 %v814
        %v863 = vunpack.c.l.b16 %v815
        %v864 = vunpack.c.l.b16 %v816
        %v865 = vunpack.c.l.b16 %v817
        %v866 = vunpack.c.l.b16 %v818
        %v867 = vunpack.c.l.b16 %v819
        %v868 = vunpack.c.l.b16 %v820
        %v869 = vunpack.c.l.b16 %v821
        %v870 = vunpack.c.l.b16 %v822
        %v871 = vunpack.c.l.b16 %v823
        %v872 = vunpack.c.l.b16 %v824
        %v873 = vunpack.c.l.b16 %v825
        %v874 = vunpack.c.l.b16 %v826
        %v875 = vunpack.c.l.b16 %v827
        %v876 = vunpack.c.l.b16 %v828
        %v877 = vunpack.c.l.b16 %v829
        %v878 = vunpack.c.l.b16 %v830
        %v879 = vunpack.c.l.b16 %v831
        %v880 = vunpack.c.l.b16 %v832
        %v881 = vunpack.c.l.b16 %v833
        %v882 = vunpack.c.l.b16 %v834
        %v883 = vunpack.c.l.b16 %v835
        %v884 = vunpack.c.l.b16 %v836
        %v885 = vpack.c.b16 %v862, %v861
        %v886 = vpack.c.b16 %v864, %v863
        %v887 = vpack.c.b16 %v866, %v865
        %v888 = vpack.c.b16 %v868, %v867
        %v889 = vpack.c.b16 %v870, %v869
        %v890 = vpack.c.b16 %v872, %v871
        %v891 = vpack.c.b16 %v874, %v873
        %v892 = vpack.c.b16 %v876, %v875
        %v893 = vpack.c.b16 %v878, %v877
        %v894 = vpack.c.b16 %v880, %v879
        %v895 = vpack.c.b16 %v882, %v881
        %v896 = vpack.c.b16 %v884, %v883
        %v910 = vsel %vm787, %v812, 0
        %912 = vmatprep.subr.bf16.mxu0 0
        %913 = vmatpush1.bf16.msra.mxu0 %v885
        %914 = vmatprep.subr.bf16.mxu0 0
        %915 = vmatpush1.bf16.msra.mxu0 %v886
        %916 = vmatprep.subr.bf16.mxu0 0
        %917 = vmatpush1.bf16.msra.mxu0 %v887
        %918 = vmatprep.subr.bf16.mxu0 0
        %919 = vmatpush1.bf16.msra.mxu0 %v888
        %920 = vmatprep.subr.bf16.mxu0 0
        %921 = vmatpush1.bf16.msra.mxu0 %v889
        %922 = vmatprep.subr.bf16.mxu0 0
        %923 = vmatpush1.bf16.msra.mxu0 %v890
        %924 = vmatprep.subr.bf16.mxu0 0
        %925 = vmatpush1.bf16.msra.mxu0 %v891
        %926 = vmatprep.subr.bf16.mxu0 0
        %927 = vmatpush1.bf16.msra.mxu0 %v892
        %928 = vmatprep.subr.bf16.mxu0 0
        %929 = vmatpush1.bf16.msra.mxu0 %v893
        %930 = vmatprep.subr.bf16.mxu0 0
        %931 = vmatpush1.bf16.msra.mxu0 %v894
        %932 = vmatprep.subr.bf16.mxu0 0
        %933 = vmatpush1.bf16.msra.mxu0 %v895
        %934 = vmatprep.subr.bf16.mxu0 0
        %935 = vmatpush1.bf16.msra.mxu0 %v896
        %936 = vmatprep.subr.bf16.mxu0 0
        %937 = vmatpush1.bf16.msra.mxu0 0
        %938 = vmatprep.subr.bf16.mxu0 0
        %939 = vmatpush1.bf16.msra.mxu0 0
        %940 = vmatprep.subr.bf16.mxu0 0
        %941 = vmatpush1.bf16.msra.mxu0 0
        %942 = vmatprep.subr.bf16.mxu0 0
        %943 = vmatpush1.bf16.msra.mxu0 0
        %944 = vmatprep.mubr.bf16.mxu0 %v910
        %945 = vmatmul.mubr.bf16.gmra.mrb[0].mxu0 %v811
        %v946 = vpop.f32.mrb[0].mxu0
        %v947 = vadd.f32 0.0, %v946
        %v948 = vpop.f32.mrb[0].mxu0
        %v949 = vpop.f32.mrb[0].mxu0
        %v950 = vpop.f32.mrb[0].mxu0
        %951 = vdwg.mxu0
        %952 = vst [vmem:[%s291] sm:$0xff] %v947
      $region44: #{simple_regression_net.1} parent=35 // pred_fallthru
        _
      %p953 = scmp.lt.s32.totalorder %s19, 0
      %s954 = scalar_select %p953, %s19, 0
      %s955 = smul.addr %s954, 8
      %s956 = scalar_lea.vmem %s4, %s955
      // Predicated region
      $region45: #{simple_regression_net.1} parent=35 // pred_check
        %p957 = pneg %p151
      $region46: #{simple_regression_net.1} parent=35 // pred_check_branch
        %959 = sbr.rel (%p957) target = $region48
      $region47: #{simple_regression_net.1} parent=35 // pred_region
        _
      $region48: #{simple_regression_net.1} parent=35 // pred_fallthru
        _
      // Predicated region
      $region49: #{simple_regression_net.1} parent=35 // pred_check
        %p960 = pneg %p151
      $region50: #{simple_regression_net.1} parent=35 // pred_check_branch
        %962 = sbr.rel (%p960) target = $region52
      $region51: #{simple_regression_net.1} parent=35 // pred_region
        %p963 = scmp.lt.s32.totalorder %s19, 0
        %s964 = scalar_select %p963, %s19, 0
        %s965 = smul.addr %s964, 8
        %s966 = scalar_lea.vmem %s4, %s965
      $region52: #{simple_regression_net.1} parent=35 // pred_fallthru
        _
    $region36: #{simple_regression_net.1} parent=5 // pred_fallthru
      _
    %p967 = scmp.le.s32.totalorder 2, %s10
    // Predicated region
    $region53: #{simple_regression_net.1} parent=5 // pred_check
      %p968 = pneg %p967
    $region54: #{simple_regression_net.1} parent=5 // pred_check_branch
      %970 = sbr.rel (%p968) target = $region56
    $region55: #{simple_regression_net.1} parent=5 // pred_region
      %s971 = ssub.s32 %s10, 2
    $region56: #{simple_regression_net.1} parent=5 // pred_fallthru
      _
  $region6: #{simple_regression_net.1} parent=0 // loop_footer
    %s14 = sadd.s32 1, %s10
  $region7: #{simple_regression_net.1} parent=0 // loop_footer_branch
    %9 = sbr.rel target = $region3
  $region8: #{simple_regression_net.1} parent=0 // loop_exit
    _

</llo_original>
